<compile_context>
chip_gen: v7x
topology: tpu7x:2x2x1
jax: 0.10.0
libtpu: 0.0.40
codegen_flags: <defaults>
</compile_context>

<pallas_src>
import math

import jax
import jax.numpy as jnp
from jax.experimental import pallas as pl
from jax.experimental.pallas import tpu as pltpu


def _round_up(x, m):
    return ((x + m - 1) // m) * m


def _erf(x):
    # Abramowitz & Stegun 7.1.26 polynomial (|abs err| < 1.5e-7). exp and the
    # approximate reciprocal go to the EUP slot; the rest is cheap f32 VALU work.
    a1, a2, a3, a4, a5 = (0.254829592, -0.284496736, 1.421413741,
                          -1.453152027, 1.061405429)
    p = 0.3275911
    ax = jnp.abs(x)
    t = pl.reciprocal(1.0 + p * ax, approx=True)
    poly = ((((a5 * t + a4) * t + a3) * t + a2) * t + a1) * t
    y = 1.0 - poly * jnp.exp(-ax * ax)
    return jnp.where(x >= 0, y, -y)


def _gelu_exact(x):
    # nn.GELU() default = exact erf-based GELU, computed in f32.
    return 0.5 * x * (1.0 + _erf(x * 0.7071067811865476))


def mlp_kernel(x_ref, w1_ref, b1_ref, w2_ref, b2_ref, o_ref):
    # x_ref: (tm, Cin) bf16 | w1: (Cin, H) bf16 | b1: (1, H) f32
    # w2: (H, Cout) bf16    | b2: (1, Cout) f32 | o_ref: (tm, Cout) f32
    x = x_ref[...]
    h = jnp.dot(x, w1_ref[...], preferred_element_type=jnp.float32) + b1_ref[...]
    h = _gelu_exact(h)                          # f32; Dropout(p=0) = identity
    h = h.astype(w2_ref.dtype)                  # bf16 feed for the second MXU pass
    out = jnp.dot(h, w2_ref[...], preferred_element_type=jnp.float32) + b2_ref[...]
    o_ref[...] = out.astype(o_ref.dtype)        # Dropout(p=0) = identity


def mlp_forward(x, params, *, row_tile=256):
    """Fused MLP forward.

    x: (..., in_features) float32.
    params: PyTorch-layout weights:
        fc1_w (hidden, in), fc1_b (hidden,), fc2_w (out, hidden), fc2_b (out,).
    Returns (..., out_features) float32.
    """
    *lead, cin = x.shape
    m = math.prod(lead) if lead else 1

    # Pre-transpose to (in, out) so the kernel computes x @ W (+ b) == x @ W_pt.T + b.
    w1 = params["fc1_w"].T.astype(jnp.bfloat16)           # (Cin, H)
    b1 = params["fc1_b"].reshape(1, -1).astype(jnp.float32)
    w2 = params["fc2_w"].T.astype(jnp.bfloat16)           # (H, Cout)
    b2 = params["fc2_b"].reshape(1, -1).astype(jnp.float32)
    hid, cout = w1.shape[1], w2.shape[1]

    xf = x.reshape(m, cin)
    tm = min(row_tile, _round_up(m, 8))                   # row tile, sublane-aligned
    mp = _round_up(m, tm)
    if mp != m:
        xf = jnp.pad(xf, ((0, mp - m), (0, 0)))
    xf = xf.astype(jnp.bfloat16)

    grid = (mp // tm,)

    # Explicit VMEM budget: double-buffered activation tiles + resident bf16
    # weights (constant index -> DMA'd once) + f32/bf16 hidden intermediates.
    vmem_bytes = 2 * (tm * cin * 2 + tm * cout * 4)       # in/out tiles, 2 buffers
    vmem_bytes += 2 * (cin * hid * 2 + hid * cout * 2)    # bf16 weights
    vmem_bytes += 2 * 4 * (hid + cout)                    # f32 biases
    vmem_bytes += tm * hid * (4 + 2)                      # f32 + bf16 hidden tensor
    vmem_limit = int(min(max(2 * vmem_bytes, 4 << 20), 48 << 20))

    out = pl.pallas_call(
        mlp_kernel,
        out_shape=jax.ShapeDtypeStruct((mp, cout), jnp.float32),
        grid=grid,
        in_specs=[
            pl.BlockSpec((tm, cin), lambda i: (i, 0)),    # activation row tile
            pl.BlockSpec((cin, hid), lambda i: (0, 0)),   # fc1 weight (resident)
            pl.BlockSpec((1, hid), lambda i: (0, 0)),     # fc1 bias
            pl.BlockSpec((hid, cout), lambda i: (0, 0)),  # fc2 weight (resident)
            pl.BlockSpec((1, cout), lambda i: (0, 0)),    # fc2 bias
        ],
        out_specs=pl.BlockSpec((tm, cout), lambda i: (i, 0)),
        compiler_params=pltpu.CompilerParams(
            dimension_semantics=("parallel",),
            vmem_limit_bytes=vmem_limit,
        ),
    )(xf, w1, b1, w2, b2)

    out = out[:m]
    return out.reshape(*lead, cout)


def mlp_ref(x, params):
    # Pure-JAX f32 reference (exact GELU) for a tolerance check.
    h = x @ params["fc1_w"].T + params["fc1_b"]
    h = jax.nn.gelu(h, approximate=False)
    return h @ params["fc2_w"].T + params["fc2_b"]


if __name__ == "__main__":
    # Small ViT-like MLP: batch=2, tokens=8, in=64, hidden=128, out=64.
    B, N, C_IN, HIDDEN, C_OUT = 2, 8, 64, 128, 64

    key = jax.random.PRNGKey(0)
    kx, k1, k2, k3, k4 = jax.random.split(key, 5)
    x = jax.random.normal(kx, (B, N, C_IN), jnp.float32)
    params = dict(
        fc1_w=0.02 * jax.random.normal(k1, (HIDDEN, C_IN), jnp.float32),
        fc1_b=0.02 * jax.random.normal(k2, (HIDDEN,), jnp.float32),
        fc2_w=0.02 * jax.random.normal(k3, (C_OUT, HIDDEN), jnp.float32),
        fc2_b=0.02 * jax.random.normal(k4, (C_OUT,), jnp.float32),
    )

    y = mlp_forward(x, params)
    jax.block_until_ready(y)
    assert y.shape == (B, N, C_OUT) and y.dtype == jnp.float32

    import numpy as np
    y_ref = np.asarray(mlp_ref(x, params))
    assert np.allclose(np.asarray(y), y_ref, atol=2e-2, rtol=2e-2)

    print("KERNEL_OK")
</pallas_src>

<mosaic_0001>
module attributes {stable_mosaic.version = 11 : i64} {
  func.func @mlp_kernel(%arg0: i32, %arg1: memref<16x64xbf16, #tpu.memory_space<vmem>>, %arg2: memref<64x128xbf16, #tpu.memory_space<vmem>>, %arg3: memref<1x128xf32, #tpu.memory_space<vmem>>, %arg4: memref<128x64xbf16, #tpu.memory_space<vmem>>, %arg5: memref<1x64xf32, #tpu.memory_space<vmem>>, %arg6: memref<16x64xf32, #tpu.memory_space<vmem>>) attributes {dimension_semantics = [#tpu.dimension_semantics<parallel>], iteration_bounds = array<i64: 1>, scalar_prefetch = 0 : i64, scratch_operands = 0 : i64, tpu.core_type = #tpu.core_type<tc>, window_params = [{transform_indices = @transform_0, window_bounds = array<i64: 16, 64>}, {pipeline_mode = #tpu.pipeline_mode<synchronous>, transform_indices = @transform_1, window_bounds = array<i64: 64, 128>}, {pipeline_mode = #tpu.pipeline_mode<synchronous>, transform_indices = @transform_2, window_bounds = array<i64: 1, 128>}, {pipeline_mode = #tpu.pipeline_mode<synchronous>, transform_indices = @transform_3, window_bounds = array<i64: 128, 64>}, {pipeline_mode = #tpu.pipeline_mode<synchronous>, transform_indices = @transform_4, window_bounds = array<i64: 1, 64>}, {transform_indices = @transform_5, window_bounds = array<i64: 16, 64>}]} {
    %c0 = arith.constant 0 : index
    %c0_0 = arith.constant 0 : index
    %0 = vector.load %arg1[%c0, %c0_0] : memref<16x64xbf16, #tpu.memory_space<vmem>>, vector<16x64xbf16>
    %c0_1 = arith.constant 0 : index
    %c0_2 = arith.constant 0 : index
    %1 = vector.load %arg2[%c0_1, %c0_2] : memref<64x128xbf16, #tpu.memory_space<vmem>>, vector<64x128xbf16>
    %cst = arith.constant dense<0.000000e+00> : vector<16x128xf32>
    %2 = tpu.matmul %0, %1, %cst {dimension_numbers = #tpu.dot_dimension_numbers<[1], [0], [0], [1], [0, 0, 1, 1], [], []>} : vector<16x64xbf16>, vector<64x128xbf16>, vector<16x128xf32> -> vector<16x128xf32>
    %c0_3 = arith.constant 0 : index
    %c0_4 = arith.constant 0 : index
    %3 = vector.load %arg3[%c0_3, %c0_4] : memref<1x128xf32, #tpu.memory_space<vmem>>, vector<1x128xf32>
    %4 = vector.broadcast %3 : vector<1x128xf32> to vector<16x128xf32>
    %5 = arith.addf %2, %4 : vector<16x128xf32>
    %cst_5 = arith.constant 5.000000e-01 : f32
    %6 = vector.broadcast %cst_5 : f32 to vector<16x128xf32>
    %7 = arith.mulf %6, %5 : vector<16x128xf32>
    %cst_6 = arith.constant 0.707106769 : f32
    %8 = vector.broadcast %cst_6 : f32 to vector<16x128xf32>
    %9 = arith.mulf %5, %8 : vector<16x128xf32>
    %10 = math.absf %9 : vector<16x128xf32>
    %cst_7 = arith.constant 0.327591091 : f32
    %11 = vector.broadcast %cst_7 : f32 to vector<16x128xf32>
    %12 = arith.mulf %11, %10 : vector<16x128xf32>
    %cst_8 = arith.constant 1.000000e+00 : f32
    %13 = vector.broadcast %cst_8 : f32 to vector<16x128xf32>
    %14 = arith.addf %13, %12 : vector<16x128xf32>
    %15 = tpu.reciprocal %14 {approx = true} : vector<16x128xf32> -> vector<16x128xf32>
    %cst_9 = arith.constant 1.06140542 : f32
    %16 = vector.broadcast %cst_9 : f32 to vector<16x128xf32>
    %17 = arith.mulf %16, %15 : vector<16x128xf32>
    %cst_10 = arith.constant -1.45315206 : f32
    %18 = vector.broadcast %cst_10 : f32 to vector<16x128xf32>
    %19 = arith.addf %17, %18 : vector<16x128xf32>
    %20 = arith.mulf %19, %15 : vector<16x128xf32>
    %cst_11 = arith.constant 1.42141378 : f32
    %21 = vector.broadcast %cst_11 : f32 to vector<16x128xf32>
    %22 = arith.addf %20, %21 : vector<16x128xf32>
    %23 = arith.mulf %22, %15 : vector<16x128xf32>
    %cst_12 = arith.constant -0.284496725 : f32
    %24 = vector.broadcast %cst_12 : f32 to vector<16x128xf32>
    %25 = arith.addf %23, %24 : vector<16x128xf32>
    %26 = arith.mulf %25, %15 : vector<16x128xf32>
    %cst_13 = arith.constant 0.254829586 : f32
    %27 = vector.broadcast %cst_13 : f32 to vector<16x128xf32>
    %28 = arith.addf %26, %27 : vector<16x128xf32>
    %29 = arith.mulf %28, %15 : vector<16x128xf32>
    %cst_14 = arith.constant 0.000000e+00 : f32
    %30 = vector.broadcast %cst_14 : f32 to vector<16x128xf32>
    %31 = arith.subf %30, %10 : vector<16x128xf32>
    %32 = arith.mulf %31, %10 : vector<16x128xf32>
    %33 = math.exp %32 : vector<16x128xf32>
    %34 = arith.mulf %29, %33 : vector<16x128xf32>
    %cst_15 = arith.constant 1.000000e+00 : f32
    %35 = vector.broadcast %cst_15 : f32 to vector<16x128xf32>
    %36 = arith.subf %35, %34 : vector<16x128xf32>
    %cst_16 = arith.constant 0.000000e+00 : f32
    %37 = vector.broadcast %cst_16 : f32 to vector<16x128xf32>
    %38 = arith.cmpf oge, %9, %37 : vector<16x128xf32>
    %cst_17 = arith.constant 0.000000e+00 : f32
    %39 = vector.broadcast %cst_17 : f32 to vector<16x128xf32>
    %40 = arith.subf %39, %36 : vector<16x128xf32>
    %41 = arith.select %38, %36, %40 : vector<16x128xi1>, vector<16x128xf32>
    %cst_18 = arith.constant 1.000000e+00 : f32
    %42 = vector.broadcast %cst_18 : f32 to vector<16x128xf32>
    %43 = arith.addf %42, %41 : vector<16x128xf32>
    %44 = arith.mulf %7, %43 : vector<16x128xf32>
    %45 = arith.truncf %44 : vector<16x128xf32> to vector<16x128xbf16>
    %c0_19 = arith.constant 0 : index
    %c0_20 = arith.constant 0 : index
    %46 = vector.load %arg4[%c0_19, %c0_20] : memref<128x64xbf16, #tpu.memory_space<vmem>>, vector<128x64xbf16>
    %cst_21 = arith.constant dense<0.000000e+00> : vector<16x64xf32>
    %47 = tpu.matmul %45, %46, %cst_21 {dimension_numbers = #tpu.dot_dimension_numbers<[1], [0], [0], [1], [0, 0, 1, 1], [], []>} : vector<16x128xbf16>, vector<128x64xbf16>, vector<16x64xf32> -> vector<16x64xf32>
    %c0_22 = arith.constant 0 : index
    %c0_23 = arith.constant 0 : index
    %48 = vector.load %arg5[%c0_22, %c0_23] : memref<1x64xf32, #tpu.memory_space<vmem>>, vector<1x64xf32>
    %49 = vector.broadcast %48 : vector<1x64xf32> to vector<16x64xf32>
    %50 = arith.addf %47, %49 : vector<16x64xf32>
    %c0_24 = arith.constant 0 : index
    %c0_25 = arith.constant 0 : index
    %51 = vector.load %arg6[%c0_24, %c0_25] : memref<16x64xf32, #tpu.memory_space<vmem>>, vector<16x64xf32>
    tpu.vector_store %arg6[%c0_24, %c0_25], %50 {strides = array<i32>} : memref<16x64xf32, #tpu.memory_space<vmem>>, vector<16x64xf32>,
    return
  }
  func.func @transform_0(%arg0: i32) -> (i32, i32) {
    %c0_i32 = arith.constant 0 : i32
    %c0_i32_0 = arith.constant 0 : i32
    return %arg0, %c0_i32 : i32, i32
  }
  func.func @transform_1(%arg0: i32) -> (i32, i32) {
    %c0_i32 = arith.constant 0 : i32
    %c0_i32_0 = arith.constant 0 : i32
    %c0_i32_1 = arith.constant 0 : i32
    return %c0_i32, %c0_i32_0 : i32, i32
  }
  func.func @transform_2(%arg0: i32) -> (i32, i32) {
    %c0_i32 = arith.constant 0 : i32
    %c0_i32_0 = arith.constant 0 : i32
    %c0_i32_1 = arith.constant 0 : i32
    return %c0_i32, %c0_i32_0 : i32, i32
  }
  func.func @transform_3(%arg0: i32) -> (i32, i32) {
    %c0_i32 = arith.constant 0 : i32
    %c0_i32_0 = arith.constant 0 : i32
    %c0_i32_1 = arith.constant 0 : i32
    return %c0_i32, %c0_i32_0 : i32, i32
  }
  func.func @transform_4(%arg0: i32) -> (i32, i32) {
    %c0_i32 = arith.constant 0 : i32
    %c0_i32_0 = arith.constant 0 : i32
    %c0_i32_1 = arith.constant 0 : i32
    return %c0_i32, %c0_i32_0 : i32, i32
  }
  func.func @transform_5(%arg0: i32) -> (i32, i32) {
    %c0_i32 = arith.constant 0 : i32
    %c0_i32_0 = arith.constant 0 : i32
    return %arg0, %c0_i32 : i32, i32
  }
}

</mosaic_0001>

<llo_original>
// kernel: tpu_custom_call.1
$region0: #{tpu_custom_call.1}
  #allocation0 [shape = 'u32[]', space=smem, size = 0x4, offset = 0x4, fixed_abs, tag = 'smem constant byte address 0x4 - core index']
  #allocation1 [shape = 'u32[144,128]{1,0:T(1,128)}', space=vmem, size = 0x12000, scoped, tag = 'internal scratch']
  %s0 = inlined_call_operand.vmem [shape: bf16[16,64], index: 0, kind: input, shape index: {}]
  %s1 = inlined_call_operand.vmem [shape: bf16[64,128], index: 1, kind: input, shape index: {}]
  %s2 = inlined_call_operand.vmem [shape: f32[1,128], index: 2, kind: input, shape index: {}]
  %s3 = inlined_call_operand.vmem [shape: bf16[128,64], index: 3, kind: input, shape index: {}]
  %s4 = inlined_call_operand.vmem [shape: f32[1,64], index: 4, kind: input, shape index: {}]
  %s5 = inlined_call_operand.hbm [shape: f32[16,64], index: 5, kind: output, shape index: {}]
  %s6 = sld [smem:[#allocation0]]
  $region30: #{tpu_custom_call.1} parent=0
    _
  %s8 = ssub.s32 1, %s6
  %s9 = scalar_select 0, %s8, %s6
  $region1: #{tpu_custom_call.1} parent=0
    #allocation2 [shape = 'u8[8192]{0}', space=vmem, size = 0x2000, scoped, tag = 'output window, operand 0, single buffered']
    #allocation3 [shape = 's32[1]{0}', space=sflag, size = 0x4, scoped, tag = 'scoped memory for tpu_custom_call.1']
    %10 = vsyncpa [#allocation3], 0
    // Predicated region
    $region2: #{tpu_custom_call.1} parent=1 // pred_check
      _
    $region3: #{tpu_custom_call.1} parent=1 // pred_check_branch
      %12 = sbr.rel (0) target = $region5
    $region4: #{tpu_custom_call.1} parent=1 // pred_region
      _
    $region5: #{tpu_custom_call.1} parent=1 // pred_fallthru
      _
    // Predicated region
    $region6: #{tpu_custom_call.1} parent=1 // pred_check
      _
    $region7: #{tpu_custom_call.1} parent=1 // pred_check_branch
      %14 = sbr.rel (0) target = $region9
    $region8: #{tpu_custom_call.1} parent=1 // pred_region
      _
    $region9: #{tpu_custom_call.1} parent=1 // pred_fallthru
      _
    // Predicated region
    $region10: #{tpu_custom_call.1} parent=1 // pred_check
      _
    $region11: #{tpu_custom_call.1} parent=1 // pred_check_branch
      %16 = sbr.rel (0) target = $region13
    $region12: #{tpu_custom_call.1} parent=1 // pred_region
      _
    $region13: #{tpu_custom_call.1} parent=1 // pred_fallthru
      _
    // Predicated region
    $region14: #{tpu_custom_call.1} parent=1 // pred_check
      _
    $region15: #{tpu_custom_call.1} parent=1 // pred_check_branch
      %18 = sbr.rel (0) target = $region17
    $region16: #{tpu_custom_call.1} parent=1 // pred_region
      _
    $region17: #{tpu_custom_call.1} parent=1 // pred_fallthru
      _
    // Predicated region
    $region18: #{tpu_custom_call.1} parent=1 // pred_check
      _
    $region19: #{tpu_custom_call.1} parent=1 // pred_check_branch
      %20 = sbr.rel (0) target = $region21
    $region20: #{tpu_custom_call.1} parent=1 // pred_region
      _
    $region21: #{tpu_custom_call.1} parent=1 // pred_fallthru
      _
    %v22 = vld [vmem:[%s0] sm:$0xf]
    %v23 = vld [vmem:[%s0 + $0x4] sm:$0xf]
    %v24 = vld [vmem:[%s1] sm:$0xf]
    %v25 = vld [vmem:[%s1 + $0x4] sm:$0xf]
    %v26 = vld [vmem:[%s1 + $0x8] sm:$0xf]
    %v27 = vld [vmem:[%s1 + $0xc] sm:$0xf]
    %v28 = vld [vmem:[%s1 + $0x10] sm:$0xf]
    %v29 = vld [vmem:[%s1 + $0x14] sm:$0xf]
    %v30 = vld [vmem:[%s1 + $0x18] sm:$0xf]
    %v31 = vld [vmem:[%s1 + $0x1c] sm:$0xf]
    %v32 = vld [vmem:[%s2] sm:$0x1]
    %v34 = vlaneseq
    %v35 = vshrl.u32 %v34, 7
    %v36 = vsub.s32 0, %v35
    %v37 = vrot.slane %v32, %v36
    %v41 = vunpack.c.l.b16 %v22
    %v42 = vunpack.c.l.b16 %v23
    %v43 = vpack.c.b16 %v42, %v41
    %v52 = vunpack.c.l.b16 %v24
    %v53 = vunpack.c.l.b16 %v25
    %v54 = vunpack.c.l.b16 %v26
    %v55 = vunpack.c.l.b16 %v27
    %v56 = vunpack.c.l.b16 %v28
    %v57 = vunpack.c.l.b16 %v29
    %v58 = vunpack.c.l.b16 %v30
    %v59 = vunpack.c.l.b16 %v31
    %v60 = vpack.c.b16 %v53, %v52
    %v61 = vpack.c.b16 %v55, %v54
    %v62 = vpack.c.b16 %v57, %v56
    %v63 = vpack.c.b16 %v59, %v58
    %vm68 = vcmask 523264
    %v70 = vsel %vm68, %v43, 0
    %72 = vmatprep.subr.bf16.mxu0 0
    %73 = vmatpush1.bf16.msra.mxu0 %v60
    %74 = vmatprep.subr.bf16.mxu0 0
    %75 = vmatpush1.bf16.msra.mxu0 %v61
    %76 = vmatprep.subr.bf16.mxu0 0
    %77 = vmatpush1.bf16.msra.mxu0 %v62
    %78 = vmatprep.subr.bf16.mxu0 0
    %79 = vmatpush1.bf16.msra.mxu0 %v63
    %80 = vmatprep.subr.bf16.mxu0 0
    %81 = vmatpush1.bf16.msra.mxu0 0
    %82 = vmatprep.subr.bf16.mxu0 0
    %83 = vmatpush1.bf16.msra.mxu0 0
    %84 = vmatprep.subr.bf16.mxu0 0
    %85 = vmatpush1.bf16.msra.mxu0 0
    %86 = vmatprep.subr.bf16.mxu0 0
    %87 = vmatpush1.bf16.msra.mxu0 0
    %88 = vmatprep.subr.bf16.mxu0 0
    %89 = vmatpush1.bf16.msra.mxu0 0
    %90 = vmatprep.subr.bf16.mxu0 0
    %91 = vmatpush1.bf16.msra.mxu0 0
    %92 = vmatprep.subr.bf16.mxu0 0
    %93 = vmatpush1.bf16.msra.mxu0 0
    %94 = vmatprep.subr.bf16.mxu0 0
    %95 = vmatpush1.bf16.msra.mxu0 0
    %96 = vmatprep.subr.bf16.mxu0 0
    %97 = vmatpush1.bf16.msra.mxu0 0
    %98 = vmatprep.subr.bf16.mxu0 0
    %99 = vmatpush1.bf16.msra.mxu0 0
    %100 = vmatprep.subr.bf16.mxu0 0
    %101 = vmatpush1.bf16.msra.mxu0 0
    %102 = vmatprep.subr.bf16.mxu0 0
    %103 = vmatpush1.bf16.msra.mxu0 0
    %104 = vmatprep.mubr.bf16.mxu0 0
    %105 = vmatmul.mubr.bf16.gmra.mrb[0].mxu0 %v70
    %v106 = vpop.f32.mrb[0].mxu0
    %v107 = vadd.f32 %v37, %v106
    %v108 = vpop.f32.mrb[0].mxu0
    %v109 = vpop.f32.mrb[0].mxu0
    %v110 = vadd.f32 %v37, %v109
    %v111 = vpop.f32.mrb[0].mxu0
    %112 = vdwg.mxu0
    %v113 = vmul.f32 %v107, 0.5
    %v114 = vmul.f32 %v110, 0.5
    %v115 = vmul.f32 %v107, 0.70710677
    %v116 = vmul.f32 %v110, 0.70710677
    %v117 = vand.u32 2147483647, %v115
    %v118 = vand.u32 2147483647, %v116
    %v119 = vmul.f32 %v117, 0.3275911
    %v120 = vmul.f32 %v118, 0.3275911
    %v121 = vadd.f32 %v119, 1.0
    %v122 = vadd.f32 %v120, 1.0
    %v123 = vrcp.pop %v121
    %v124 = vrcp.pop %v122
    %v125 = vmul.f32 %v123, 1.0614054
    %v126 = vmul.f32 %v124, 1.0614054
    %v127 = vadd.f32 %v125, -1.4531521
    %v128 = vadd.f32 %v126, -1.4531521
    %v129 = vmul.f32 %v127, %v123
    %v130 = vmul.f32 %v128, %v124
    %v131 = vadd.f32 %v129, 1.4214138
    %v132 = vadd.f32 %v130, 1.4214138
    %v133 = vmul.f32 %v131, %v123
    %v134 = vmul.f32 %v132, %v124
    %v135 = vadd.f32 %v133, -0.28449672
    %v136 = vadd.f32 %v134, -0.28449672
    %v137 = vmul.f32 %v135, %v123
    %v138 = vmul.f32 %v136, %v124
    %v139 = vadd.f32 %v137, 0.2548296
    %v140 = vadd.f32 %v138, 0.2548296
    %v141 = vmul.f32 %v139, %v123
    %v142 = vmul.f32 %v140, %v124
    %v143 = vsub.f32 0.0, %v117
    %v144 = vsub.f32 0.0, %v118
    %v145 = vmul.f32 %v143, %v117
    %v146 = vmul.f32 %v144, %v118
    %v147 = vmul.f32 %v145, 1.442695
    %v148 = vpow.pop %v147
    %v149 = vmul.f32 %v146, 1.442695
    %v150 = vpow.pop %v149
    %v151 = vmul.f32 %v141, %v148
    %v152 = vmul.f32 %v142, %v150
    %v153 = vsub.f32 1.0, %v151
    %v154 = vsub.f32 1.0, %v152
    %vm155 = vcmp.ge.f32.partialorder %v115, 0.0
    %vm156 = vcmp.ge.f32.partialorder %v116, 0.0
    %v157 = vsub.f32 0.0, %v153
    %v158 = vsub.f32 0.0, %v154
    %v159 = vsel %vm155, %v153, %v157
    %v160 = vsel %vm156, %v154, %v158
    %v161 = vadd.f32 %v159, 1.0
    %v162 = vadd.f32 %v160, 1.0
    %v163 = vmul.f32 %v113, %v161
    %v164 = vmul.f32 %v114, %v162
    %v165 = vpack.c.bf16 %v164, %v163
    %v166 = vld [vmem:[%s3] sm:$0xf]
    %v167 = vld [vmem:[%s3 + $0x4] sm:$0xf]
    %v168 = vld [vmem:[%s3 + $0x8] sm:$0xf]
    %v169 = vld [vmem:[%s3 + $0xc] sm:$0xf]
    %v170 = vld [vmem:[%s3 + $0x10] sm:$0xf]
    %v171 = vld [vmem:[%s3 + $0x14] sm:$0xf]
    %v172 = vld [vmem:[%s3 + $0x18] sm:$0xf]
    %v173 = vld [vmem:[%s3 + $0x1c] sm:$0xf]
    %v174 = vld [vmem:[%s3 + $0x20] sm:$0xf]
    %v175 = vld [vmem:[%s3 + $0x24] sm:$0xf]
    %v176 = vld [vmem:[%s3 + $0x28] sm:$0xf]
    %v177 = vld [vmem:[%s3 + $0x2c] sm:$0xf]
    %v178 = vld [vmem:[%s3 + $0x30] sm:$0xf]
    %v179 = vld [vmem:[%s3 + $0x34] sm:$0xf]
    %v180 = vld [vmem:[%s3 + $0x38] sm:$0xf]
    %v181 = vld [vmem:[%s3 + $0x3c] sm:$0xf]
    %v182 = vld [vmem:[%s4] sm:$0x1]
    %v184 = vlaneseq
    %v185 = vshrl.u32 %v184, 7
    %v186 = vsub.s32 0, %v185
    %v187 = vrot.slane %v182, %v186
    %v205 = vunpack.c.l.b16 %v166
    %v206 = vunpack.c.l.b16 %v167
    %v207 = vunpack.c.l.b16 %v168
    %v208 = vunpack.c.l.b16 %v169
    %v209 = vunpack.c.l.b16 %v170
    %v210 = vunpack.c.l.b16 %v171
    %v211 = vunpack.c.l.b16 %v172
    %v212 = vunpack.c.l.b16 %v173
    %v213 = vunpack.c.l.b16 %v174
    %v214 = vunpack.c.l.b16 %v175
    %v215 = vunpack.c.l.b16 %v176
    %v216 = vunpack.c.l.b16 %v177
    %v217 = vunpack.c.l.b16 %v178
    %v218 = vunpack.c.l.b16 %v179
    %v219 = vunpack.c.l.b16 %v180
    %v220 = vunpack.c.l.b16 %v181
    %v221 = vpack.c.b16 %v206, %v205
    %v222 = vpack.c.b16 %v208, %v207
    %v223 = vpack.c.b16 %v210, %v209
    %v224 = vpack.c.b16 %v212, %v211
    %v225 = vpack.c.b16 %v214, %v213
    %v226 = vpack.c.b16 %v216, %v215
    %v227 = vpack.c.b16 %v218, %v217
    %v228 = vpack.c.b16 %v220, %v219
    %237 = vmatprep.subr.bf16.mxu0 0
    %238 = vmatpush1.bf16.msra.mxu0 %v221
    %239 = vmatprep.subr.bf16.mxu0 0
    %240 = vmatpush1.bf16.msra.mxu0 %v222
    %241 = vmatprep.subr.bf16.mxu0 0
    %242 = vmatpush1.bf16.msra.mxu0 %v223
    %243 = vmatprep.subr.bf16.mxu0 0
    %244 = vmatpush1.bf16.msra.mxu0 %v224
    %245 = vmatprep.subr.bf16.mxu0 0
    %246 = vmatpush1.bf16.msra.mxu0 %v225
    %247 = vmatprep.subr.bf16.mxu0 0
    %248 = vmatpush1.bf16.msra.mxu0 %v226
    %249 = vmatprep.subr.bf16.mxu0 0
    %250 = vmatpush1.bf16.msra.mxu0 %v227
    %251 = vmatprep.subr.bf16.mxu0 0
    %252 = vmatpush1.bf16.msra.mxu0 %v228
    %253 = vmatprep.subr.bf16.mxu0 0
    %254 = vmatpush1.bf16.msra.mxu0 0
    %255 = vmatprep.subr.bf16.mxu0 0
    %256 = vmatpush1.bf16.msra.mxu0 0
    %257 = vmatprep.subr.bf16.mxu0 0
    %258 = vmatpush1.bf16.msra.mxu0 0
    %259 = vmatprep.subr.bf16.mxu0 0
    %260 = vmatpush1.bf16.msra.mxu0 0
    %261 = vmatprep.subr.bf16.mxu0 0
    %262 = vmatpush1.bf16.msra.mxu0 0
    %263 = vmatprep.subr.bf16.mxu0 0
    %264 = vmatpush1.bf16.msra.mxu0 0
    %265 = vmatprep.subr.bf16.mxu0 0
    %266 = vmatpush1.bf16.msra.mxu0 0
    %267 = vmatprep.subr.bf16.mxu0 0
    %268 = vmatpush1.bf16.msra.mxu0 0
    %269 = vmatprep.mubr.bf16.mxu0 0
    %270 = vmatmul.mubr.bf16.gmra.mrb[0].mxu0 %v165
    %v271 = vpop.f32.mrb[0].mxu0
    %v272 = vadd.f32 %v187, %v271
    %v273 = vpop.f32.mrb[0].mxu0
    %v274 = vpop.f32.mrb[0].mxu0
    %v275 = vadd.f32 %v187, %v274
    %v276 = vpop.f32.mrb[0].mxu0
    %277 = vdwg.mxu0
    %278 = vst.msk [vmem:[#allocation2] sm:$0xff] %vm68, %v272
    %279 = vst.msk [vmem:[#allocation2 + $0x8] sm:$0xff] %vm68, %v275
    // Predicated region
    $region22: #{tpu_custom_call.1} parent=1 // pred_check
      _
    $region23: #{tpu_custom_call.1} parent=1 // pred_check_branch
      %281 = sbr.rel (0) target = $region25
    $region24: #{tpu_custom_call.1} parent=1 // pred_region
      %s283 = ssub.s32 256, 256
      %284 = vsyncadd [#allocation3], %s283
      %s285 = sshll.u32 [#allocation2], 4
      %s286 = int_to_ptr.vmem [resolvable:$true] %s285
      %291 = dma.vmem_to_hbm [thread:$0]  %s286, 256, %s5, [#allocation3], 128, 128, 8
    $region25: #{tpu_custom_call.1} parent=1 // pred_fallthru
      _
    // Predicated region
    $region26: #{tpu_custom_call.1} parent=1 // pred_check
      _
    $region27: #{tpu_custom_call.1} parent=1 // pred_check_branch
      %293 = sbr.rel (0) target = $region29
    $region28: #{tpu_custom_call.1} parent=1 // pred_region
      %294 = dma.done [#allocation3], 256
    $region29: #{tpu_custom_call.1} parent=1 // pred_fallthru
      _
    %295 = vsyncpa [#allocation3], 1

</llo_original>
